<compile_context>
chip_gen: v7x
topology: tpu7x:2x2x1
jax: 0.10.0
libtpu: 0.0.40
codegen_flags: <defaults>
</compile_context>

<pallas_src>
import functools

import jax
import jax.numpy as jnp
from jax.experimental import pallas as pl
from jax.experimental.pallas import tpu as pltpu


def _decoder_kernel(x_ref, wih_ref, b_ref, whh_ref, wfc_ref, bfc_ref, out_ref,
                    *, seq_len, hidden):
    H = hidden
    T = seq_len
    B = x_ref.shape[0]

    x = x_ref[...]  # (B, I) — identical at every timestep

    # One-time input projection for both directions (lane-concatenated weights),
    # kept in f32 (off the per-step critical path; preserves precision).
    xg_wide = jnp.dot(x, wih_ref[...], preferred_element_type=jnp.float32) + b_ref[...]
    # Sublane-stack: rows 0:B = forward gates preact, rows B:2B = reverse.
    xg = jnp.concatenate([xg_wide[:, :4 * H], xg_wide[:, 4 * H:]], axis=0)  # (2B, 4H)

    # Recurrent weights as bf16 MXU operands; accumulation stays f32.
    whh = whh_ref[...].astype(jnp.bfloat16)  # (2H, 4H) = [[whh_f],[whh_r]]

    # Block-diagonal selection mask for the merged recurrent matmul:
    # rows 0:B keep lanes 0:H (forward h), rows B:2B keep lanes H:2H (reverse h).
    row = jax.lax.broadcasted_iota(jnp.int32, (2 * B, 2 * H), 0)
    col = jax.lax.broadcasted_iota(jnp.int32, (2 * B, 2 * H), 1)
    blk_mask = (row < B) == (col < H)

    def cell(gates, c_prev):
        # One sigmoid over both directions' gates (2B, 4H) — single EUP push.
        # g-gate columns were pre-scaled by 2 in the wrapper, so tanh(z) = 2*sig(2z)-1.
        s = jax.nn.sigmoid(gates)
        i_g = s[:, 0 * H:1 * H]
        f_g = s[:, 1 * H:2 * H]
        g_g = 2.0 * s[:, 2 * H:3 * H] - 1.0
        o_g = s[:, 3 * H:4 * H]
        c_new = f_g * c_prev + i_g * g_g
        h_new = o_g * jnp.tanh(c_new)          # second (and last) EUP push per step
        return h_new, c_new

    # t = 0 peeled: h = c = 0, so gates == xg — no recurrent matmul needed.
    h, c = cell(xg, jnp.zeros((2 * B, H), jnp.float32))
    hs = [h]

    # Fully-unrolled recurrence; both directions advance in one fused chain.
    for _ in range(1, T):
        h_blk = jnp.where(blk_mask, jnp.concatenate([h, h], axis=1), 0.0)  # (2B, 2H)
        gates = xg + jnp.dot(h_blk.astype(jnp.bfloat16), whh,
                             preferred_element_type=jnp.float32)           # 1 MXU push/step
        h, c = cell(gates, c)
        hs.append(h)

    # Tail: assemble (T*B, 2H) rows [h_fwd(t) | h_rev(T-1-t)] in t-major order
    # (pure sublane/lane concats of vreg values — no scratch, no regrouping) and do
    # one fused matmul against the unsplit fc weight.
    rows = [jnp.concatenate([hs[t][:B, :], hs[T - 1 - t][B:, :]], axis=1)
            for t in range(T)]                                   # each (B, 2H)
    h2d = jnp.concatenate(rows, axis=0)                          # (T*B, 2H)
    out_ref[...] = (jnp.dot(h2d, wfc_ref[...], preferred_element_type=jnp.float32)
                    + bfc_ref[...])


def decoder_forward(x, params, seq_len):
    B, _ = x.shape
    H = params["whh_f"].shape[0]
    O = params["wfc"].shape[1]

    # One-time XLA-side weight prep:
    #  * scale g-gate (columns 2H:3H) by 2 so the kernel can use tanh(z)=2*sig(2z)-1,
    #  * lane-concat the two input projections, row-stack the two recurrent weights.
    def scale_g(w):
        return w.at[..., 2 * H:3 * H].multiply(2.0)

    wih_cat = jnp.concatenate([scale_g(params["wih_f"]), scale_g(params["wih_r"])], axis=1)  # (I, 8H)
    b_cat = jnp.concatenate([scale_g(params["b_f"]), scale_g(params["b_r"])], axis=1)        # (1, 8H)
    whh_cat = jnp.concatenate([scale_g(params["whh_f"]), scale_g(params["whh_r"])], axis=0)  # (2H, 4H)

    kernel = functools.partial(_decoder_kernel, seq_len=seq_len, hidden=H)
    vmem = pl.BlockSpec(memory_space=pltpu.MemorySpace.VMEM)

    # No grid: single invocation, everything fits trivially in VMEM on v5e/v6e/v7x.
    out_flat = pl.pallas_call(
        kernel,
        out_shape=jax.ShapeDtypeStruct((seq_len * B, O), jnp.float32),
        in_specs=[vmem] * 6,
        out_specs=vmem,
    )(x, wih_cat, b_cat, whh_cat, params["wfc"], params["bfc"])

    # t-major (T*B, O) -> batch-first (B, T, O); tiny (256 B), done XLA-side.
    return out_flat.reshape(seq_len, B, O).transpose(1, 0, 2)


def decoder_reference(x, params, seq_len):
    """Pure-JAX f32 reference of the PyTorch forward, for correctness checking."""
    H = params["whh_f"].shape[0]
    B = x.shape[0]

    def run(wih, whh, b):
        h = jnp.zeros((B, H), jnp.float32)
        c = jnp.zeros((B, H), jnp.float32)
        hs = []
        for _ in range(seq_len):
            gates = x @ wih + h @ whh + b
            i_g = jax.nn.sigmoid(gates[:, :H])
            f_g = jax.nn.sigmoid(gates[:, H:2 * H])
            g_g = jnp.tanh(gates[:, 2 * H:3 * H])
            o_g = jax.nn.sigmoid(gates[:, 3 * H:])
            c = f_g * c + i_g * g_g
            h = o_g * jnp.tanh(c)
            hs.append(h)
        return jnp.stack(hs, axis=1)  # (B, T, H)

    hf = run(params["wih_f"], params["whh_f"], params["b_f"])
    hr = run(params["wih_r"], params["whh_r"], params["b_r"])[:, ::-1, :]
    hcat = jnp.concatenate([hf, hr], axis=-1)      # (B, T, 2H)
    return hcat @ params["wfc"] + params["bfc"]


def init_params(key, no_features, output_size):
    """Deterministic synthetic params matching nn.LSTM / nn.Linear shapes."""
    H = 2 * no_features            # hidden_size
    I = 2 * no_features            # input_size = no_features * num_directions
    k = 1.0 / jnp.sqrt(jnp.float32(H))
    keys = jax.random.split(key, 12)

    def u(kk, shape):
        return jax.random.uniform(kk, shape, jnp.float32, -k, k)

    # PyTorch stores weight_ih: (4H, I), weight_hh: (4H, H); we pass transposed.
    wih_f = u(keys[0], (I, 4 * H))
    whh_f = u(keys[1], (H, 4 * H))
    b_f = (u(keys[2], (1, 4 * H)) + u(keys[3], (1, 4 * H)))   # b_ih + b_hh
    wih_r = u(keys[4], (I, 4 * H))
    whh_r = u(keys[5], (H, 4 * H))
    b_r = (u(keys[6], (1, 4 * H)) + u(keys[7], (1, 4 * H)))
    # fc: Linear(2H -> output_size); weight (O, 2H) in torch -> transposed (2H, O)
    kfc = 1.0 / jnp.sqrt(jnp.float32(2 * H))
    wfc = jax.random.uniform(keys[8], (2 * H, output_size), jnp.float32, -kfc, kfc)
    bfc = jax.random.uniform(keys[9], (1, output_size), jnp.float32, -kfc, kfc)

    return dict(wih_f=wih_f, whh_f=whh_f, b_f=b_f,
                wih_r=wih_r, whh_r=whh_r, b_r=b_r,
                wfc=wfc, bfc=bfc)


if __name__ == "__main__":
    seq_len = 8
    no_features = 16          # -> hidden_size = 32, LSTM input_size = 32
    output_size = 4
    batch = 2

    key = jax.random.PRNGKey(0)
    kx, kp = jax.random.split(key)
    # Decoder input: latent vector of size no_features * num_directions = 2*no_features
    x = jax.random.normal(kx, (batch, 2 * no_features), jnp.float32)
    params = init_params(kp, no_features, output_size)

    out = decoder_forward(x, params, seq_len)
    out = jax.block_until_ready(out)

    ref = decoder_reference(x, params, seq_len)
    assert out.shape == (batch, seq_len, output_size), out.shape
    # Tolerance loosened vs. the pure-f32 version: the recurrent matmul feeds the
    # MXU bf16 operands (f32 accumulation), contributing ~1e-3 relative error.
    assert jnp.allclose(out, ref, atol=1e-2, rtol=1e-2), float(jnp.abs(out - ref).max())

    print("KERNEL_OK")
</pallas_src>

<mosaic_0001>
module attributes {stable_mosaic.version = 11 : i64} {
  func.func @_decoder_kernel(%arg0: memref<2x32xf32, #tpu.memory_space<vmem>>, %arg1: memref<32x256xf32, #tpu.memory_space<vmem>>, %arg2: memref<1x256xf32, #tpu.memory_space<vmem>>, %arg3: memref<64x128xf32, #tpu.memory_space<vmem>>, %arg4: memref<64x4xf32, #tpu.memory_space<vmem>>, %arg5: memref<1x4xf32, #tpu.memory_space<vmem>>, %arg6: memref<16x4xf32, #tpu.memory_space<vmem>>) attributes {dimension_semantics = [], scalar_prefetch = 0 : i64, scratch_operands = 0 : i64, tpu.core_type = #tpu.core_type<tc>} {
    %c0 = arith.constant 0 : index
    %c0_0 = arith.constant 0 : index
    %0 = vector.load %arg0[%c0, %c0_0] : memref<2x32xf32, #tpu.memory_space<vmem>>, vector<2x32xf32>
    %c0_1 = arith.constant 0 : index
    %c0_2 = arith.constant 0 : index
    %1 = vector.load %arg1[%c0_1, %c0_2] : memref<32x256xf32, #tpu.memory_space<vmem>>, vector<32x256xf32>
    %cst = arith.constant dense<0.000000e+00> : vector<2x256xf32>
    %2 = tpu.matmul %0, %1, %cst {dimension_numbers = #tpu.dot_dimension_numbers<[1], [0], [0], [1], [0, 0, 1, 1], [], []>} : vector<2x32xf32>, vector<32x256xf32>, vector<2x256xf32> -> vector<2x256xf32>
    %c0_3 = arith.constant 0 : index
    %c0_4 = arith.constant 0 : index
    %3 = vector.load %arg2[%c0_3, %c0_4] : memref<1x256xf32, #tpu.memory_space<vmem>>, vector<1x256xf32>
    %4 = vector.broadcast %3 : vector<1x256xf32> to vector<2x256xf32>
    %5 = arith.addf %2, %4 : vector<2x256xf32>
    %6 = vector.extract_strided_slice %5 {offsets = [0, 0], sizes = [2, 128], strides = [1, 1]} : vector<2x256xf32> to vector<2x128xf32>
    %7 = vector.extract_strided_slice %5 {offsets = [0, 128], sizes = [2, 128], strides = [1, 1]} : vector<2x256xf32> to vector<2x128xf32>
    %8 = tpu.concatenate %6, %7 in 0 : vector<2x128xf32>, vector<2x128xf32> -> vector<4x128xf32>
    %c0_5 = arith.constant 0 : index
    %c0_6 = arith.constant 0 : index
    %9 = vector.load %arg3[%c0_5, %c0_6] : memref<64x128xf32, #tpu.memory_space<vmem>>, vector<64x128xf32>
    %10 = arith.truncf %9 : vector<64x128xf32> to vector<64x128xbf16>
    %11 = tpu.iota {dimensions = array<i32: 0>} : vector<4x64xi32>
    %12 = tpu.iota {dimensions = array<i32: 1>} : vector<4x64xi32>
    %c2_i32 = arith.constant 2 : i32
    %13 = vector.broadcast %c2_i32 : i32 to vector<4x64xi32>
    %14 = arith.cmpi slt, %11, %13 : vector<4x64xi32>
    %c32_i32 = arith.constant 32 : i32
    %15 = vector.broadcast %c32_i32 : i32 to vector<4x64xi32>
    %16 = arith.cmpi slt, %12, %15 : vector<4x64xi32>
    %17 = arith.xori %14, %16 : vector<4x64xi1>
    %cst_7 = arith.constant dense<true> : vector<4x64xi1>
    %18 = arith.xori %17, %cst_7 : vector<4x64xi1>
    %cst_8 = arith.constant 0.000000e+00 : f32
    %19 = vector.broadcast %cst_8 : f32 to vector<4x32xf32>
    %20 = arith.negf %8 : vector<4x128xf32>
    %21 = math.exp %20 : vector<4x128xf32>
    %cst_9 = arith.constant 1.000000e+00 : f32
    %22 = vector.broadcast %cst_9 : f32 to vector<4x128xf32>
    %23 = arith.addf %22, %21 : vector<4x128xf32>
    %24 = arith.divf %22, %23 : vector<4x128xf32>
    %25 = vector.extract_strided_slice %24 {offsets = [0, 0], sizes = [4, 32], strides = [1, 1]} : vector<4x128xf32> to vector<4x32xf32>
    %26 = vector.extract_strided_slice %24 {offsets = [0, 32], sizes = [4, 32], strides = [1, 1]} : vector<4x128xf32> to vector<4x32xf32>
    %27 = vector.extract_strided_slice %24 {offsets = [0, 64], sizes = [4, 32], strides = [1, 1]} : vector<4x128xf32> to vector<4x32xf32>
    %cst_10 = arith.constant 2.000000e+00 : f32
    %28 = vector.broadcast %cst_10 : f32 to vector<4x32xf32>
    %29 = arith.mulf %28, %27 : vector<4x32xf32>
    %cst_11 = arith.constant 1.000000e+00 : f32
    %30 = vector.broadcast %cst_11 : f32 to vector<4x32xf32>
    %31 = arith.subf %29, %30 : vector<4x32xf32>
    %32 = vector.extract_strided_slice %24 {offsets = [0, 96], sizes = [4, 32], strides = [1, 1]} : vector<4x128xf32> to vector<4x32xf32>
    %33 = arith.mulf %26, %19 : vector<4x32xf32>
    %34 = arith.mulf %25, %31 : vector<4x32xf32>
    %35 = arith.addf %33, %34 : vector<4x32xf32>
    %36 = math.tanh %35 : vector<4x32xf32>
    %37 = arith.mulf %32, %36 : vector<4x32xf32>
    %38 = tpu.concatenate %37, %37 in 1 : vector<4x32xf32>, vector<4x32xf32> -> vector<4x64xf32>
    %cst_12 = arith.constant 0.000000e+00 : f32
    %39 = vector.broadcast %cst_12 : f32 to vector<4x64xf32>
    %40 = arith.select %18, %38, %39 : vector<4x64xi1>, vector<4x64xf32>
    %41 = arith.truncf %40 : vector<4x64xf32> to vector<4x64xbf16>
    %cst_13 = arith.constant dense<0.000000e+00> : vector<4x128xf32>
    %42 = tpu.matmul %41, %10, %cst_13 {dimension_numbers = #tpu.dot_dimension_numbers<[1], [0], [0], [1], [0, 0, 1, 1], [], []>} : vector<4x64xbf16>, vector<64x128xbf16>, vector<4x128xf32> -> vector<4x128xf32>
    %43 = arith.addf %8, %42 : vector<4x128xf32>
    %44 = arith.negf %43 : vector<4x128xf32>
    %45 = math.exp %44 : vector<4x128xf32>
    %cst_14 = arith.constant 1.000000e+00 : f32
    %46 = vector.broadcast %cst_14 : f32 to vector<4x128xf32>
    %47 = arith.addf %46, %45 : vector<4x128xf32>
    %48 = arith.divf %46, %47 : vector<4x128xf32>
    %49 = vector.extract_strided_slice %48 {offsets = [0, 0], sizes = [4, 32], strides = [1, 1]} : vector<4x128xf32> to vector<4x32xf32>
    %50 = vector.extract_strided_slice %48 {offsets = [0, 32], sizes = [4, 32], strides = [1, 1]} : vector<4x128xf32> to vector<4x32xf32>
    %51 = vector.extract_strided_slice %48 {offsets = [0, 64], sizes = [4, 32], strides = [1, 1]} : vector<4x128xf32> to vector<4x32xf32>
    %cst_15 = arith.constant 2.000000e+00 : f32
    %52 = vector.broadcast %cst_15 : f32 to vector<4x32xf32>
    %53 = arith.mulf %52, %51 : vector<4x32xf32>
    %cst_16 = arith.constant 1.000000e+00 : f32
    %54 = vector.broadcast %cst_16 : f32 to vector<4x32xf32>
    %55 = arith.subf %53, %54 : vector<4x32xf32>
    %56 = vector.extract_strided_slice %48 {offsets = [0, 96], sizes = [4, 32], strides = [1, 1]} : vector<4x128xf32> to vector<4x32xf32>
    %57 = arith.mulf %50, %35 : vector<4x32xf32>
    %58 = arith.mulf %49, %55 : vector<4x32xf32>
    %59 = arith.addf %57, %58 : vector<4x32xf32>
    %60 = math.tanh %59 : vector<4x32xf32>
    %61 = arith.mulf %56, %60 : vector<4x32xf32>
    %62 = tpu.concatenate %61, %61 in 1 : vector<4x32xf32>, vector<4x32xf32> -> vector<4x64xf32>
    %cst_17 = arith.constant 0.000000e+00 : f32
    %63 = vector.broadcast %cst_17 : f32 to vector<4x64xf32>
    %64 = arith.select %18, %62, %63 : vector<4x64xi1>, vector<4x64xf32>
    %65 = arith.truncf %64 : vector<4x64xf32> to vector<4x64xbf16>
    %cst_18 = arith.constant dense<0.000000e+00> : vector<4x128xf32>
    %66 = tpu.matmul %65, %10, %cst_18 {dimension_numbers = #tpu.dot_dimension_numbers<[1], [0], [0], [1], [0, 0, 1, 1], [], []>} : vector<4x64xbf16>, vector<64x128xbf16>, vector<4x128xf32> -> vector<4x128xf32>
    %67 = arith.addf %8, %66 : vector<4x128xf32>
    %68 = arith.negf %67 : vector<4x128xf32>
    %69 = math.exp %68 : vector<4x128xf32>
    %cst_19 = arith.constant 1.000000e+00 : f32
    %70 = vector.broadcast %cst_19 : f32 to vector<4x128xf32>
    %71 = arith.addf %70, %69 : vector<4x128xf32>
    %72 = arith.divf %70, %71 : vector<4x128xf32>
    %73 = vector.extract_strided_slice %72 {offsets = [0, 0], sizes = [4, 32], strides = [1, 1]} : vector<4x128xf32> to vector<4x32xf32>
    %74 = vector.extract_strided_slice %72 {offsets = [0, 32], sizes = [4, 32], strides = [1, 1]} : vector<4x128xf32> to vector<4x32xf32>
    %75 = vector.extract_strided_slice %72 {offsets = [0, 64], sizes = [4, 32], strides = [1, 1]} : vector<4x128xf32> to vector<4x32xf32>
    %cst_20 = arith.constant 2.000000e+00 : f32
    %76 = vector.broadcast %cst_20 : f32 to vector<4x32xf32>
    %77 = arith.mulf %76, %75 : vector<4x32xf32>
    %cst_21 = arith.constant 1.000000e+00 : f32
    %78 = vector.broadcast %cst_21 : f32 to vector<4x32xf32>
    %79 = arith.subf %77, %78 : vector<4x32xf32>
    %80 = vector.extract_strided_slice %72 {offsets = [0, 96], sizes = [4, 32], strides = [1, 1]} : vector<4x128xf32> to vector<4x32xf32>
    %81 = arith.mulf %74, %59 : vector<4x32xf32>
    %82 = arith.mulf %73, %79 : vector<4x32xf32>
    %83 = arith.addf %81, %82 : vector<4x32xf32>
    %84 = math.tanh %83 : vector<4x32xf32>
    %85 = arith.mulf %80, %84 : vector<4x32xf32>
    %86 = tpu.concatenate %85, %85 in 1 : vector<4x32xf32>, vector<4x32xf32> -> vector<4x64xf32>
    %cst_22 = arith.constant 0.000000e+00 : f32
    %87 = vector.broadcast %cst_22 : f32 to vector<4x64xf32>
    %88 = arith.select %18, %86, %87 : vector<4x64xi1>, vector<4x64xf32>
    %89 = arith.truncf %88 : vector<4x64xf32> to vector<4x64xbf16>
    %cst_23 = arith.constant dense<0.000000e+00> : vector<4x128xf32>
    %90 = tpu.matmul %89, %10, %cst_23 {dimension_numbers = #tpu.dot_dimension_numbers<[1], [0], [0], [1], [0, 0, 1, 1], [], []>} : vector<4x64xbf16>, vector<64x128xbf16>, vector<4x128xf32> -> vector<4x128xf32>
    %91 = arith.addf %8, %90 : vector<4x128xf32>
    %92 = arith.negf %91 : vector<4x128xf32>
    %93 = math.exp %92 : vector<4x128xf32>
    %cst_24 = arith.constant 1.000000e+00 : f32
    %94 = vector.broadcast %cst_24 : f32 to vector<4x128xf32>
    %95 = arith.addf %94, %93 : vector<4x128xf32>
    %96 = arith.divf %94, %95 : vector<4x128xf32>
    %97 = vector.extract_strided_slice %96 {offsets = [0, 0], sizes = [4, 32], strides = [1, 1]} : vector<4x128xf32> to vector<4x32xf32>
    %98 = vector.extract_strided_slice %96 {offsets = [0, 32], sizes = [4, 32], strides = [1, 1]} : vector<4x128xf32> to vector<4x32xf32>
    %99 = vector.extract_strided_slice %96 {offsets = [0, 64], sizes = [4, 32], strides = [1, 1]} : vector<4x128xf32> to vector<4x32xf32>
    %cst_25 = arith.constant 2.000000e+00 : f32
    %100 = vector.broadcast %cst_25 : f32 to vector<4x32xf32>
    %101 = arith.mulf %100, %99 : vector<4x32xf32>
    %cst_26 = arith.constant 1.000000e+00 : f32
    %102 = vector.broadcast %cst_26 : f32 to vector<4x32xf32>
    %103 = arith.subf %101, %102 : vector<4x32xf32>
    %104 = vector.extract_strided_slice %96 {offsets = [0, 96], sizes = [4, 32], strides = [1, 1]} : vector<4x128xf32> to vector<4x32xf32>
    %105 = arith.mulf %98, %83 : vector<4x32xf32>
    %106 = arith.mulf %97, %103 : vector<4x32xf32>
    %107 = arith.addf %105, %106 : vector<4x32xf32>
    %108 = math.tanh %107 : vector<4x32xf32>
    %109 = arith.mulf %104, %108 : vector<4x32xf32>
    %110 = tpu.concatenate %109, %109 in 1 : vector<4x32xf32>, vector<4x32xf32> -> vector<4x64xf32>
    %cst_27 = arith.constant 0.000000e+00 : f32
    %111 = vector.broadcast %cst_27 : f32 to vector<4x64xf32>
    %112 = arith.select %18, %110, %111 : vector<4x64xi1>, vector<4x64xf32>
    %113 = arith.truncf %112 : vector<4x64xf32> to vector<4x64xbf16>
    %cst_28 = arith.constant dense<0.000000e+00> : vector<4x128xf32>
    %114 = tpu.matmul %113, %10, %cst_28 {dimension_numbers = #tpu.dot_dimension_numbers<[1], [0], [0], [1], [0, 0, 1, 1], [], []>} : vector<4x64xbf16>, vector<64x128xbf16>, vector<4x128xf32> -> vector<4x128xf32>
    %115 = arith.addf %8, %114 : vector<4x128xf32>
    %116 = arith.negf %115 : vector<4x128xf32>
    %117 = math.exp %116 : vector<4x128xf32>
    %cst_29 = arith.constant 1.000000e+00 : f32
    %118 = vector.broadcast %cst_29 : f32 to vector<4x128xf32>
    %119 = arith.addf %118, %117 : vector<4x128xf32>
    %120 = arith.divf %118, %119 : vector<4x128xf32>
    %121 = vector.extract_strided_slice %120 {offsets = [0, 0], sizes = [4, 32], strides = [1, 1]} : vector<4x128xf32> to vector<4x32xf32>
    %122 = vector.extract_strided_slice %120 {offsets = [0, 32], sizes = [4, 32], strides = [1, 1]} : vector<4x128xf32> to vector<4x32xf32>
    %123 = vector.extract_strided_slice %120 {offsets = [0, 64], sizes = [4, 32], strides = [1, 1]} : vector<4x128xf32> to vector<4x32xf32>
    %cst_30 = arith.constant 2.000000e+00 : f32
    %124 = vector.broadcast %cst_30 : f32 to vector<4x32xf32>
    %125 = arith.mulf %124, %123 : vector<4x32xf32>
    %cst_31 = arith.constant 1.000000e+00 : f32
    %126 = vector.broadcast %cst_31 : f32 to vector<4x32xf32>
    %127 = arith.subf %125, %126 : vector<4x32xf32>
    %128 = vector.extract_strided_slice %120 {offsets = [0, 96], sizes = [4, 32], strides = [1, 1]} : vector<4x128xf32> to vector<4x32xf32>
    %129 = arith.mulf %122, %107 : vector<4x32xf32>
    %130 = arith.mulf %121, %127 : vector<4x32xf32>
    %131 = arith.addf %129, %130 : vector<4x32xf32>
    %132 = math.tanh %131 : vector<4x32xf32>
    %133 = arith.mulf %128, %132 : vector<4x32xf32>
    %134 = tpu.concatenate %133, %133 in 1 : vector<4x32xf32>, vector<4x32xf32> -> vector<4x64xf32>
    %cst_32 = arith.constant 0.000000e+00 : f32
    %135 = vector.broadcast %cst_32 : f32 to vector<4x64xf32>
    %136 = arith.select %18, %134, %135 : vector<4x64xi1>, vector<4x64xf32>
    %137 = arith.truncf %136 : vector<4x64xf32> to vector<4x64xbf16>
    %cst_33 = arith.constant dense<0.000000e+00> : vector<4x128xf32>
    %138 = tpu.matmul %137, %10, %cst_33 {dimension_numbers = #tpu.dot_dimension_numbers<[1], [0], [0], [1], [0, 0, 1, 1], [], []>} : vector<4x64xbf16>, vector<64x128xbf16>, vector<4x128xf32> -> vector<4x128xf32>
    %139 = arith.addf %8, %138 : vector<4x128xf32>
    %140 = arith.negf %139 : vector<4x128xf32>
    %141 = math.exp %140 : vector<4x128xf32>
    %cst_34 = arith.constant 1.000000e+00 : f32
    %142 = vector.broadcast %cst_34 : f32 to vector<4x128xf32>
    %143 = arith.addf %142, %141 : vector<4x128xf32>
    %144 = arith.divf %142, %143 : vector<4x128xf32>
    %145 = vector.extract_strided_slice %144 {offsets = [0, 0], sizes = [4, 32], strides = [1, 1]} : vector<4x128xf32> to vector<4x32xf32>
    %146 = vector.extract_strided_slice %144 {offsets = [0, 32], sizes = [4, 32], strides = [1, 1]} : vector<4x128xf32> to vector<4x32xf32>
    %147 = vector.extract_strided_slice %144 {offsets = [0, 64], sizes = [4, 32], strides = [1, 1]} : vector<4x128xf32> to vector<4x32xf32>
    %cst_35 = arith.constant 2.000000e+00 : f32
    %148 = vector.broadcast %cst_35 : f32 to vector<4x32xf32>
    %149 = arith.mulf %148, %147 : vector<4x32xf32>
    %cst_36 = arith.constant 1.000000e+00 : f32
    %150 = vector.broadcast %cst_36 : f32 to vector<4x32xf32>
    %151 = arith.subf %149, %150 : vector<4x32xf32>
    %152 = vector.extract_strided_slice %144 {offsets = [0, 96], sizes = [4, 32], strides = [1, 1]} : vector<4x128xf32> to vector<4x32xf32>
    %153 = arith.mulf %146, %131 : vector<4x32xf32>
    %154 = arith.mulf %145, %151 : vector<4x32xf32>
    %155 = arith.addf %153, %154 : vector<4x32xf32>
    %156 = math.tanh %155 : vector<4x32xf32>
    %157 = arith.mulf %152, %156 : vector<4x32xf32>
    %158 = tpu.concatenate %157, %157 in 1 : vector<4x32xf32>, vector<4x32xf32> -> vector<4x64xf32>
    %cst_37 = arith.constant 0.000000e+00 : f32
    %159 = vector.broadcast %cst_37 : f32 to vector<4x64xf32>
    %160 = arith.select %18, %158, %159 : vector<4x64xi1>, vector<4x64xf32>
    %161 = arith.truncf %160 : vector<4x64xf32> to vector<4x64xbf16>
    %cst_38 = arith.constant dense<0.000000e+00> : vector<4x128xf32>
    %162 = tpu.matmul %161, %10, %cst_38 {dimension_numbers = #tpu.dot_dimension_numbers<[1], [0], [0], [1], [0, 0, 1, 1], [], []>} : vector<4x64xbf16>, vector<64x128xbf16>, vector<4x128xf32> -> vector<4x128xf32>
    %163 = arith.addf %8, %162 : vector<4x128xf32>
    %164 = arith.negf %163 : vector<4x128xf32>
    %165 = math.exp %164 : vector<4x128xf32>
    %cst_39 = arith.constant 1.000000e+00 : f32
    %166 = vector.broadcast %cst_39 : f32 to vector<4x128xf32>
    %167 = arith.addf %166, %165 : vector<4x128xf32>
    %168 = arith.divf %166, %167 : vector<4x128xf32>
    %169 = vector.extract_strided_slice %168 {offsets = [0, 0], sizes = [4, 32], strides = [1, 1]} : vector<4x128xf32> to vector<4x32xf32>
    %170 = vector.extract_strided_slice %168 {offsets = [0, 32], sizes = [4, 32], strides = [1, 1]} : vector<4x128xf32> to vector<4x32xf32>
    %171 = vector.extract_strided_slice %168 {offsets = [0, 64], sizes = [4, 32], strides = [1, 1]} : vector<4x128xf32> to vector<4x32xf32>
    %cst_40 = arith.constant 2.000000e+00 : f32
    %172 = vector.broadcast %cst_40 : f32 to vector<4x32xf32>
    %173 = arith.mulf %172, %171 : vector<4x32xf32>
    %cst_41 = arith.constant 1.000000e+00 : f32
    %174 = vector.broadcast %cst_41 : f32 to vector<4x32xf32>
    %175 = arith.subf %173, %174 : vector<4x32xf32>
    %176 = vector.extract_strided_slice %168 {offsets = [0, 96], sizes = [4, 32], strides = [1, 1]} : vector<4x128xf32> to vector<4x32xf32>
    %177 = arith.mulf %170, %155 : vector<4x32xf32>
    %178 = arith.mulf %169, %175 : vector<4x32xf32>
    %179 = arith.addf %177, %178 : vector<4x32xf32>
    %180 = math.tanh %179 : vector<4x32xf32>
    %181 = arith.mulf %176, %180 : vector<4x32xf32>
    %182 = tpu.concatenate %181, %181 in 1 : vector<4x32xf32>, vector<4x32xf32> -> vector<4x64xf32>
    %cst_42 = arith.constant 0.000000e+00 : f32
    %183 = vector.broadcast %cst_42 : f32 to vector<4x64xf32>
    %184 = arith.select %18, %182, %183 : vector<4x64xi1>, vector<4x64xf32>
    %185 = arith.truncf %184 : vector<4x64xf32> to vector<4x64xbf16>
    %cst_43 = arith.constant dense<0.000000e+00> : vector<4x128xf32>
    %186 = tpu.matmul %185, %10, %cst_43 {dimension_numbers = #tpu.dot_dimension_numbers<[1], [0], [0], [1], [0, 0, 1, 1], [], []>} : vector<4x64xbf16>, vector<64x128xbf16>, vector<4x128xf32> -> vector<4x128xf32>
    %187 = arith.addf %8, %186 : vector<4x128xf32>
    %188 = arith.negf %187 : vector<4x128xf32>
    %189 = math.exp %188 : vector<4x128xf32>
    %cst_44 = arith.constant 1.000000e+00 : f32
    %190 = vector.broadcast %cst_44 : f32 to vector<4x128xf32>
    %191 = arith.addf %190, %189 : vector<4x128xf32>
    %192 = arith.divf %190, %191 : vector<4x128xf32>
    %193 = vector.extract_strided_slice %192 {offsets = [0, 0], sizes = [4, 32], strides = [1, 1]} : vector<4x128xf32> to vector<4x32xf32>
    %194 = vector.extract_strided_slice %192 {offsets = [0, 32], sizes = [4, 32], strides = [1, 1]} : vector<4x128xf32> to vector<4x32xf32>
    %195 = vector.extract_strided_slice %192 {offsets = [0, 64], sizes = [4, 32], strides = [1, 1]} : vector<4x128xf32> to vector<4x32xf32>
    %cst_45 = arith.constant 2.000000e+00 : f32
    %196 = vector.broadcast %cst_45 : f32 to vector<4x32xf32>
    %197 = arith.mulf %196, %195 : vector<4x32xf32>
    %cst_46 = arith.constant 1.000000e+00 : f32
    %198 = vector.broadcast %cst_46 : f32 to vector<4x32xf32>
    %199 = arith.subf %197, %198 : vector<4x32xf32>
    %200 = vector.extract_strided_slice %192 {offsets = [0, 96], sizes = [4, 32], strides = [1, 1]} : vector<4x128xf32> to vector<4x32xf32>
    %201 = arith.mulf %194, %179 : vector<4x32xf32>
    %202 = arith.mulf %193, %199 : vector<4x32xf32>
    %203 = arith.addf %201, %202 : vector<4x32xf32>
    %204 = math.tanh %203 : vector<4x32xf32>
    %205 = arith.mulf %200, %204 : vector<4x32xf32>
    %206 = vector.extract_strided_slice %37 {offsets = [0, 0], sizes = [2, 32], strides = [1, 1]} : vector<4x32xf32> to vector<2x32xf32>
    %207 = vector.extract_strided_slice %205 {offsets = [2, 0], sizes = [2, 32], strides = [1, 1]} : vector<4x32xf32> to vector<2x32xf32>
    %208 = tpu.concatenate %206, %207 in 1 : vector<2x32xf32>, vector<2x32xf32> -> vector<2x64xf32>
    %209 = vector.extract_strided_slice %61 {offsets = [0, 0], sizes = [2, 32], strides = [1, 1]} : vector<4x32xf32> to vector<2x32xf32>
    %210 = vector.extract_strided_slice %181 {offsets = [2, 0], sizes = [2, 32], strides = [1, 1]} : vector<4x32xf32> to vector<2x32xf32>
    %211 = tpu.concatenate %209, %210 in 1 : vector<2x32xf32>, vector<2x32xf32> -> vector<2x64xf32>
    %212 = vector.extract_strided_slice %85 {offsets = [0, 0], sizes = [2, 32], strides = [1, 1]} : vector<4x32xf32> to vector<2x32xf32>
    %213 = vector.extract_strided_slice %157 {offsets = [2, 0], sizes = [2, 32], strides = [1, 1]} : vector<4x32xf32> to vector<2x32xf32>
    %214 = tpu.concatenate %212, %213 in 1 : vector<2x32xf32>, vector<2x32xf32> -> vector<2x64xf32>
    %215 = vector.extract_strided_slice %109 {offsets = [0, 0], sizes = [2, 32], strides = [1, 1]} : vector<4x32xf32> to vector<2x32xf32>
    %216 = vector.extract_strided_slice %133 {offsets = [2, 0], sizes = [2, 32], strides = [1, 1]} : vector<4x32xf32> to vector<2x32xf32>
    %217 = tpu.concatenate %215, %216 in 1 : vector<2x32xf32>, vector<2x32xf32> -> vector<2x64xf32>
    %218 = vector.extract_strided_slice %133 {offsets = [0, 0], sizes = [2, 32], strides = [1, 1]} : vector<4x32xf32> to vector<2x32xf32>
    %219 = vector.extract_strided_slice %109 {offsets = [2, 0], sizes = [2, 32], strides = [1, 1]} : vector<4x32xf32> to vector<2x32xf32>
    %220 = tpu.concatenate %218, %219 in 1 : vector<2x32xf32>, vector<2x32xf32> -> vector<2x64xf32>
    %221 = vector.extract_strided_slice %157 {offsets = [0, 0], sizes = [2, 32], strides = [1, 1]} : vector<4x32xf32> to vector<2x32xf32>
    %222 = vector.extract_strided_slice %85 {offsets = [2, 0], sizes = [2, 32], strides = [1, 1]} : vector<4x32xf32> to vector<2x32xf32>
    %223 = tpu.concatenate %221, %222 in 1 : vector<2x32xf32>, vector<2x32xf32> -> vector<2x64xf32>
    %224 = vector.extract_strided_slice %181 {offsets = [0, 0], sizes = [2, 32], strides = [1, 1]} : vector<4x32xf32> to vector<2x32xf32>
    %225 = vector.extract_strided_slice %61 {offsets = [2, 0], sizes = [2, 32], strides = [1, 1]} : vector<4x32xf32> to vector<2x32xf32>
    %226 = tpu.concatenate %224, %225 in 1 : vector<2x32xf32>, vector<2x32xf32> -> vector<2x64xf32>
    %227 = vector.extract_strided_slice %205 {offsets = [0, 0], sizes = [2, 32], strides = [1, 1]} : vector<4x32xf32> to vector<2x32xf32>
    %228 = vector.extract_strided_slice %37 {offsets = [2, 0], sizes = [2, 32], strides = [1, 1]} : vector<4x32xf32> to vector<2x32xf32>
    %229 = tpu.concatenate %227, %228 in 1 : vector<2x32xf32>, vector<2x32xf32> -> vector<2x64xf32>
    %230 = tpu.concatenate %208, %211, %214, %217, %220, %223, %226, %229 in 0 : vector<2x64xf32>, vector<2x64xf32>, vector<2x64xf32>, vector<2x64xf32>, vector<2x64xf32>, vector<2x64xf32>, vector<2x64xf32>, vector<2x64xf32> -> vector<16x64xf32>
    %c0_47 = arith.constant 0 : index
    %c0_48 = arith.constant 0 : index
    %231 = vector.load %arg4[%c0_47, %c0_48] : memref<64x4xf32, #tpu.memory_space<vmem>>, vector<64x4xf32>
    %cst_49 = arith.constant dense<0.000000e+00> : vector<16x4xf32>
    %232 = tpu.matmul %230, %231, %cst_49 {dimension_numbers = #tpu.dot_dimension_numbers<[1], [0], [0], [1], [0, 0, 1, 1], [], []>} : vector<16x64xf32>, vector<64x4xf32>, vector<16x4xf32> -> vector<16x4xf32>
    %c0_50 = arith.constant 0 : index
    %c0_51 = arith.constant 0 : index
    %233 = vector.load %arg5[%c0_50, %c0_51] : memref<1x4xf32, #tpu.memory_space<vmem>>, vector<1x4xf32>
    %234 = vector.broadcast %233 : vector<1x4xf32> to vector<16x4xf32>
    %235 = arith.addf %232, %234 : vector<16x4xf32>
    %c0_52 = arith.constant 0 : index
    %c0_53 = arith.constant 0 : index
    %236 = vector.load %arg6[%c0_52, %c0_53] : memref<16x4xf32, #tpu.memory_space<vmem>>, vector<16x4xf32>
    tpu.vector_store %arg6[%c0_52, %c0_53], %235 {strides = array<i32>} : memref<16x4xf32, #tpu.memory_space<vmem>>, vector<16x4xf32>,
    return
  }
}

</mosaic_0001>

<llo_original>
// kernel: tpu_custom_call.1
$region0: #{tpu_custom_call.1}
  #allocation0 [shape = 'u32[]', space=smem, size = 0x4, offset = 0x4, fixed_abs, tag = 'smem constant byte address 0x4 - core index']
  #allocation1 [shape = 'u32[144,128]{1,0:T(1,128)}', space=vmem, size = 0x12000, scoped, tag = 'internal scratch']
  %s0 = inlined_call_operand.vmem [shape: f32[2,32], index: 0, kind: input, shape index: {}]
  %s1 = inlined_call_operand.vmem [shape: f32[32,256], index: 1, kind: input, shape index: {}]
  %s2 = inlined_call_operand.vmem [shape: f32[1,256], index: 2, kind: input, shape index: {}]
  %s3 = inlined_call_operand.hbm [shape: f32[64,128], index: 3, kind: input, shape index: {}]
  %s4 = inlined_call_operand.vmem [shape: f32[64,4], index: 4, kind: input, shape index: {}]
  %s5 = inlined_call_operand.vmem [shape: f32[1,4], index: 5, kind: input, shape index: {}]
  %s6 = inlined_call_operand.vmem [shape: f32[16,4], index: 6, kind: output, shape index: {}]
  %s7 = sld [smem:[#allocation0]]
  $region38: #{tpu_custom_call.1} parent=0
    _
  %s9 = ssub.s32 1, %s7
  %s10 = scalar_select 0, %s9, %s7
  $region1: #{tpu_custom_call.1} parent=0
    #allocation2 [shape = 'u8[32768]{0}', space=vmem, size = 0x8000, scoped, tag = 'input window, operand 3, single buffered']
    #allocation3 [shape = 's32[1]{0}', space=sflag, size = 0x4, scoped, tag = 'scoped memory for tpu_custom_call.1']
    %11 = vsyncpa [#allocation3], 0
    // Predicated region
    $region2: #{tpu_custom_call.1} parent=1 // pred_check
      _
    $region3: #{tpu_custom_call.1} parent=1 // pred_check_branch
      %13 = sbr.rel (0) target = $region5
    $region4: #{tpu_custom_call.1} parent=1 // pred_region
      _
    $region5: #{tpu_custom_call.1} parent=1 // pred_fallthru
      _
    // Predicated region
    $region6: #{tpu_custom_call.1} parent=1 // pred_check
      _
    $region7: #{tpu_custom_call.1} parent=1 // pred_check_branch
      %15 = sbr.rel (0) target = $region9
    $region8: #{tpu_custom_call.1} parent=1 // pred_region
      _
    $region9: #{tpu_custom_call.1} parent=1 // pred_fallthru
      _
    // Predicated region
    $region10: #{tpu_custom_call.1} parent=1 // pred_check
      _
    $region11: #{tpu_custom_call.1} parent=1 // pred_check_branch
      %17 = sbr.rel (0) target = $region13
    $region12: #{tpu_custom_call.1} parent=1 // pred_region
      _
    $region13: #{tpu_custom_call.1} parent=1 // pred_fallthru
      _
    // Predicated region
    $region14: #{tpu_custom_call.1} parent=1 // pred_check
      _
    $region15: #{tpu_custom_call.1} parent=1 // pred_check_branch
      %19 = sbr.rel (0) target = $region17
    $region16: #{tpu_custom_call.1} parent=1 // pred_region
      %s21 = ssub.s32 1024, 1024
      %22 = vsyncadd [#allocation3], %s21
      %s23 = sshll.u32 [#allocation2], 4
      %s24 = int_to_ptr.vmem [resolvable:$true] %s23
      %29 = dma.hbm_to_vmem [thread:$0]  %s3, 1024, %s24, [#allocation3], 128, 128, 8
    $region17: #{tpu_custom_call.1} parent=1 // pred_fallthru
      _
    // Predicated region
    $region18: #{tpu_custom_call.1} parent=1 // pred_check
      _
    $region19: #{tpu_custom_call.1} parent=1 // pred_check_branch
      %31 = sbr.rel (0) target = $region21
    $region20: #{tpu_custom_call.1} parent=1 // pred_region
      _
    $region21: #{tpu_custom_call.1} parent=1 // pred_fallthru
      _
    // Predicated region
    $region22: #{tpu_custom_call.1} parent=1 // pred_check
      _
    $region23: #{tpu_custom_call.1} parent=1 // pred_check_branch
      %33 = sbr.rel (0) target = $region25
    $region24: #{tpu_custom_call.1} parent=1 // pred_region
      _
    $region25: #{tpu_custom_call.1} parent=1 // pred_fallthru
      _
    // Predicated region
    $region26: #{tpu_custom_call.1} parent=1 // pred_check
      _
    $region27: #{tpu_custom_call.1} parent=1 // pred_check_branch
      %35 = sbr.rel (0) target = $region29
    $region28: #{tpu_custom_call.1} parent=1 // pred_region
      %36 = dma.done [#allocation3], 1024
    $region29: #{tpu_custom_call.1} parent=1 // pred_fallthru
      _
    %v38 = vld [vmem:[%s0] sm:$0x3]
    %v39 = vld [vmem:[%s1] sm:$0xff]
    %v40 = vld [vmem:[%s1 + $0x8] sm:$0xff]
    %v41 = vld [vmem:[%s1 + $0x10] sm:$0xff]
    %v42 = vld [vmem:[%s1 + $0x18] sm:$0xff]
    %v43 = vld [vmem:[%s1 + $0x20] sm:$0xff]
    %v44 = vld [vmem:[%s1 + $0x28] sm:$0xff]
    %v45 = vld [vmem:[%s1 + $0x30] sm:$0xff]
    %v46 = vld [vmem:[%s1 + $0x38] sm:$0xff]
    %v47 = vld [vmem:[%s2] sm:$0x3]
    %v49 = vlaneseq
    %v50 = vshrl.u32 %v49, 7
    %v51 = vsub.s32 0, %v50
    %v52 = vrot.slane %v47, %v51
    %v53 = vlaneseq
    %v54 = vshrl.u32 %v53, 7
    %v55 = vsub.s32 1, %v54
    %v56 = vrot.slane %v47, %v55
    %vm59 = vcmask 261120
    %v61 = vsel %vm59, %v38, 0
    %63 = vmatprep.subr.mxu0 %v40
    %64 = vmatpush1.msra.mxu0 %v39
    %65 = vmatprep.subr.mxu0 %v42
    %66 = vmatpush1.msra.mxu0 %v41
    %67 = vmatprep.subr.mxu0 %v44
    %68 = vmatpush1.msra.mxu0 %v43
    %69 = vmatprep.subr.mxu0 %v46
    %70 = vmatpush1.msra.mxu0 %v45
    %71 = vmatprep.subr.mxu0 0.0
    %72 = vmatpush1.msra.mxu0 0.0
    %73 = vmatprep.subr.mxu0 0.0
    %74 = vmatpush1.msra.mxu0 0.0
    %75 = vmatprep.subr.mxu0 0.0
    %76 = vmatpush1.msra.mxu0 0.0
    %77 = vmatprep.subr.mxu0 0.0
    %78 = vmatpush1.msra.mxu0 0.0
    %79 = vmatprep.subr.mxu0 0.0
    %80 = vmatpush1.msra.mxu0 0.0
    %81 = vmatprep.subr.mxu0 0.0
    %82 = vmatpush1.msra.mxu0 0.0
    %83 = vmatprep.subr.mxu0 0.0
    %84 = vmatpush1.msra.mxu0 0.0
    %85 = vmatprep.subr.mxu0 0.0
    %86 = vmatpush1.msra.mxu0 0.0
    %87 = vmatprep.subr.mxu0 0.0
    %88 = vmatpush1.msra.mxu0 0.0
    %89 = vmatprep.subr.mxu0 0.0
    %90 = vmatpush1.msra.mxu0 0.0
    %91 = vmatprep.subr.mxu0 0.0
    %92 = vmatpush1.msra.mxu0 0.0
    %93 = vmatprep.subr.mxu0 0.0
    %94 = vmatpush1.msra.mxu0 0.0
    %95 = vmatprep.subr.mxu0 0.0
    %96 = vmatpush1.msra.mxu0 0.0
    %97 = vmatprep.subr.mxu0 0.0
    %98 = vmatpush1.msra.mxu0 0.0
    %99 = vmatprep.subr.mxu0 0.0
    %100 = vmatpush1.msra.mxu0 0.0
    %101 = vmatprep.subr.mxu0 0.0
    %102 = vmatpush1.msra.mxu0 0.0
    %103 = vmatprep.subr.mxu0 0.0
    %104 = vmatpush1.msra.mxu0 0.0
    %105 = vmatprep.subr.mxu0 0.0
    %106 = vmatpush1.msra.mxu0 0.0
    %107 = vmatprep.subr.mxu0 0.0
    %108 = vmatpush1.msra.mxu0 0.0
    %109 = vmatprep.subr.mxu0 0.0
    %110 = vmatpush1.msra.mxu0 0.0
    %111 = vmatprep.subr.mxu0 0.0
    %112 = vmatpush1.msra.mxu0 0.0
    %113 = vmatprep.subr.mxu0 0.0
    %114 = vmatpush1.msra.mxu0 0.0
    %115 = vmatprep.subr.mxu0 0.0
    %116 = vmatpush1.msra.mxu0 0.0
    %117 = vmatprep.subr.mxu0 0.0
    %118 = vmatpush1.msra.mxu0 0.0
    %119 = vmatprep.subr.mxu0 0.0
    %120 = vmatpush1.msra.mxu0 0.0
    %121 = vmatprep.subr.mxu0 0.0
    %122 = vmatpush1.msra.mxu0 0.0
    %123 = vmatprep.subr.mxu0 0.0
    %124 = vmatpush1.msra.mxu0 0.0
    %125 = vmatprep.subr.mxu0 0.0
    %126 = vmatpush1.msra.mxu0 0.0
    %127 = vmatprep.mubr.f32.mxu0 0.0
    %128 = vmatmul.mubr.f32.gmra.mrb[0].mxu0 %v61
    %v129 = vpop.f32.mrb[0].mxu0
    %v130 = vadd.f32 %v52, %v129
    %v131 = vpop.f32.mrb[0].mxu0
    %v132 = vadd.f32 %v56, %v131
    %133 = vdwg.mxu0
    %v135 = vrot.slane %v132, 6
    %vm137 = vcmask 1041408
    %v138 = vsel %vm137, %v130, %v135
    %v139 = vld [vmem:[#allocation2] sm:$0xff]
    %v140 = vld [vmem:[#allocation2 + $0x8] sm:$0xff]
    %v141 = vld [vmem:[#allocation2 + $0x10] sm:$0xff]
    %v142 = vld [vmem:[#allocation2 + $0x18] sm:$0xff]
    %v143 = vld [vmem:[#allocation2 + $0x20] sm:$0xff]
    %v144 = vld [vmem:[#allocation2 + $0x28] sm:$0xff]
    %v145 = vld [vmem:[#allocation2 + $0x30] sm:$0xff]
    %v146 = vld [vmem:[#allocation2 + $0x38] sm:$0xff]
    %v147 = vpack.c.bf16 %v140, %v139
    %v148 = vpack.c.bf16 %v142, %v141
    %v149 = vpack.c.bf16 %v144, %v143
    %v150 = vpack.c.bf16 %v146, %v145
    %v151 = vlaneseq
    %v152 = vshrl.u32 %v151, 7
    %v153 = vlaneseq
    %v154 = vand.u32 %v153, 127
    %vm155 = vcmp.lt.s32.totalorder %v152, 2
    %vm156 = vcmp.lt.s32.totalorder %v154, 32
    %vm157 = vmxor %vm155, %vm156
    %vm158 = vmxor %vm157, 1
    %v159 = vxor.u32 %v138, 2147483648
    %v160 = vmul.f32 %v159, 1.442695
    %v161 = vpow.pop %v160
    %v162 = vadd.f32 %v161, 1.0
    %v163 = vrcp.pop %v162
    %v164 = vmul.f32 1.0, %v163
    %v165 = vmul.f32 %v164, 2.0
    %v166 = vsub.f32 %v165, 1.0
    %v167 = vmul.f32 %v164, 0.0
    %169 = vrot.lane.b32.xlu0 %v166, 64
    %v170 = vpop.permute.xlu0 %169
    %v172 = vmul.f32 %v164, %v170
    %174 = vrot.lane.b32.xlu0 %v172, 32
    %v175 = vpop.permute.xlu0 %174
    %v177 = vadd.f32 %v167, %v175
    %v178 = vtanh.pop %v177
    %180 = vrot.lane.b32.xlu0 %v178, 64
    %v181 = vpop.permute.xlu0 %180
    %v183 = vmul.f32 %v164, %v181
    %185 = vrot.lane.b32.xlu0 %v183, 32
    %v186 = vpop.permute.xlu0 %185
    %188 = vrot.lane.b32.xlu0 %v183, 64
    %v189 = vpop.permute.xlu0 %188
    %v191 = vsel %vm59, %v186, %v189
    %v192 = vsel %vm158, %v191, 0.0
    %v193 = vpack.c.bf16 %v192, %v192
    %vm194 = vcmask 523264
    %v196 = vsel %vm194, %v193, 0
    %198 = vmatprep.subr.bf16.mxu0 0
    %199 = vmatpush1.bf16.msra.mxu0 %v147
    %200 = vmatprep.subr.bf16.mxu0 0
    %201 = vmatpush1.bf16.msra.mxu0 %v148
    %202 = vmatprep.subr.bf16.mxu0 0
    %203 = vmatpush1.bf16.msra.mxu0 %v149
    %204 = vmatprep.subr.bf16.mxu0 0
    %205 = vmatpush1.bf16.msra.mxu0 %v150
    %206 = vmatprep.subr.bf16.mxu0 0
    %207 = vmatpush1.bf16.msra.mxu0 0
    %208 = vmatprep.subr.bf16.mxu0 0
    %209 = vmatpush1.bf16.msra.mxu0 0
    %210 = vmatprep.subr.bf16.mxu0 0
    %211 = vmatpush1.bf16.msra.mxu0 0
    %212 = vmatprep.subr.bf16.mxu0 0
    %213 = vmatpush1.bf16.msra.mxu0 0
    %214 = vmatprep.subr.bf16.mxu0 0
    %215 = vmatpush1.bf16.msra.mxu0 0
    %216 = vmatprep.subr.bf16.mxu0 0
    %217 = vmatpush1.bf16.msra.mxu0 0
    %218 = vmatprep.subr.bf16.mxu0 0
    %219 = vmatpush1.bf16.msra.mxu0 0
    %220 = vmatprep.subr.bf16.mxu0 0
    %221 = vmatpush1.bf16.msra.mxu0 0
    %222 = vmatprep.subr.bf16.mxu0 0
    %223 = vmatpush1.bf16.msra.mxu0 0
    %224 = vmatprep.subr.bf16.mxu0 0
    %225 = vmatpush1.bf16.msra.mxu0 0
    %226 = vmatprep.subr.bf16.mxu0 0
    %227 = vmatpush1.bf16.msra.mxu0 0
    %228 = vmatprep.subr.bf16.mxu0 0
    %229 = vmatpush1.bf16.msra.mxu0 0
    %230 = vmatprep.mubr.bf16.mxu0 0
    %231 = vmatmul.mubr.bf16.gmra.mrb[0].mxu0 %v196
    %v232 = vpop.f32.mrb[0].mxu0
    %v233 = vadd.f32 0.0, %v232
    %v234 = vpop.f32.mrb[0].mxu0
    %v235 = vpop.f32.mrb[0].mxu0
    %v236 = vpop.f32.mrb[0].mxu0
    %237 = vdwg.mxu0
    %v238 = vadd.f32 %v138, %v233
    %v239 = vxor.u32 %v238, 2147483648
    %v240 = vmul.f32 %v239, 1.442695
    %v241 = vpow.pop %v240
    %v242 = vadd.f32 %v241, 1.0
    %v243 = vrcp.pop %v242
    %v244 = vmul.f32 1.0, %v243
    %v245 = vmul.f32 %v244, 2.0
    %v246 = vsub.f32 %v245, 1.0
    %v247 = vmul.f32 %v244, %v177
    %249 = vrot.lane.b32.xlu0 %v246, 64
    %v250 = vpop.permute.xlu0 %249
    %v252 = vmul.f32 %v244, %v250
    %254 = vrot.lane.b32.xlu0 %v252, 32
    %v255 = vpop.permute.xlu0 %254
    %v257 = vadd.f32 %v247, %v255
    %v258 = vtanh.pop %v257
    %260 = vrot.lane.b32.xlu0 %v258, 64
    %v261 = vpop.permute.xlu0 %260
    %v263 = vmul.f32 %v244, %v261
    %265 = vrot.lane.b32.xlu0 %v263, 32
    %v266 = vpop.permute.xlu0 %265
    %268 = vrot.lane.b32.xlu0 %v263, 64
    %v269 = vpop.permute.xlu0 %268
    %v271 = vsel %vm59, %v266, %v269
    %v272 = vsel %vm158, %v271, 0.0
    %v273 = vpack.c.bf16 %v272, %v272
    %v275 = vsel %vm194, %v273, 0
    %277 = vmatprep.subr.bf16.mxu0 0
    %278 = vmatpush1.bf16.msra.mxu0 %v147
    %279 = vmatprep.subr.bf16.mxu0 0
    %280 = vmatpush1.bf16.msra.mxu0 %v148
    %281 = vmatprep.subr.bf16.mxu0 0
    %282 = vmatpush1.bf16.msra.mxu0 %v149
    %283 = vmatprep.subr.bf16.mxu0 0
    %284 = vmatpush1.bf16.msra.mxu0 %v150
    %285 = vmatprep.subr.bf16.mxu0 0
    %286 = vmatpush1.bf16.msra.mxu0 0
    %287 = vmatprep.subr.bf16.mxu0 0
    %288 = vmatpush1.bf16.msra.mxu0 0
    %289 = vmatprep.subr.bf16.mxu0 0
    %290 = vmatpush1.bf16.msra.mxu0 0
    %291 = vmatprep.subr.bf16.mxu0 0
    %292 = vmatpush1.bf16.msra.mxu0 0
    %293 = vmatprep.subr.bf16.mxu0 0
    %294 = vmatpush1.bf16.msra.mxu0 0
    %295 = vmatprep.subr.bf16.mxu0 0
    %296 = vmatpush1.bf16.msra.mxu0 0
    %297 = vmatprep.subr.bf16.mxu0 0
    %298 = vmatpush1.bf16.msra.mxu0 0
    %299 = vmatprep.subr.bf16.mxu0 0
    %300 = vmatpush1.bf16.msra.mxu0 0
    %301 = vmatprep.subr.bf16.mxu0 0
    %302 = vmatpush1.bf16.msra.mxu0 0
    %303 = vmatprep.subr.bf16.mxu0 0
    %304 = vmatpush1.bf16.msra.mxu0 0
    %305 = vmatprep.subr.bf16.mxu0 0
    %306 = vmatpush1.bf16.msra.mxu0 0
    %307 = vmatprep.subr.bf16.mxu0 0
    %308 = vmatpush1.bf16.msra.mxu0 0
    %309 = vmatprep.mubr.bf16.mxu0 0
    %310 = vmatmul.mubr.bf16.gmra.mrb[0].mxu0 %v275
    %v311 = vpop.f32.mrb[0].mxu0
    %v312 = vadd.f32 0.0, %v311
    %v313 = vpop.f32.mrb[0].mxu0
    %v314 = vpop.f32.mrb[0].mxu0
    %v315 = vpop.f32.mrb[0].mxu0
    %316 = vdwg.mxu0
    %v317 = vadd.f32 %v138, %v312
    %v318 = vxor.u32 %v317, 2147483648
    %v319 = vmul.f32 %v318, 1.442695
    %v320 = vpow.pop %v319
    %v321 = vadd.f32 %v320, 1.0
    %v322 = vrcp.pop %v321
    %v323 = vmul.f32 1.0, %v322
    %v324 = vmul.f32 %v323, 2.0
    %v325 = vsub.f32 %v324, 1.0
    %v326 = vmul.f32 %v323, %v257
    %328 = vrot.lane.b32.xlu0 %v325, 64
    %v329 = vpop.permute.xlu0 %328
    %v331 = vmul.f32 %v323, %v329
    %333 = vrot.lane.b32.xlu0 %v331, 32
    %v334 = vpop.permute.xlu0 %333
    %v336 = vadd.f32 %v326, %v334
    %v337 = vtanh.pop %v336
    %339 = vrot.lane.b32.xlu0 %v337, 64
    %v340 = vpop.permute.xlu0 %339
    %v342 = vmul.f32 %v323, %v340
    %344 = vrot.lane.b32.xlu0 %v342, 32
    %v345 = vpop.permute.xlu0 %344
    %347 = vrot.lane.b32.xlu0 %v342, 64
    %v348 = vpop.permute.xlu0 %347
    %v350 = vsel %vm59, %v345, %v348
    %v351 = vsel %vm158, %v350, 0.0
    %v352 = vpack.c.bf16 %v351, %v351
    %v354 = vsel %vm194, %v352, 0
    %356 = vmatprep.subr.bf16.mxu0 0
    %357 = vmatpush1.bf16.msra.mxu0 %v147
    %358 = vmatprep.subr.bf16.mxu0 0
    %359 = vmatpush1.bf16.msra.mxu0 %v148
    %360 = vmatprep.subr.bf16.mxu0 0
    %361 = vmatpush1.bf16.msra.mxu0 %v149
    %362 = vmatprep.subr.bf16.mxu0 0
    %363 = vmatpush1.bf16.msra.mxu0 %v150
    %364 = vmatprep.subr.bf16.mxu0 0
    %365 = vmatpush1.bf16.msra.mxu0 0
    %366 = vmatprep.subr.bf16.mxu0 0
    %367 = vmatpush1.bf16.msra.mxu0 0
    %368 = vmatprep.subr.bf16.mxu0 0
    %369 = vmatpush1.bf16.msra.mxu0 0
    %370 = vmatprep.subr.bf16.mxu0 0
    %371 = vmatpush1.bf16.msra.mxu0 0
    %372 = vmatprep.subr.bf16.mxu0 0
    %373 = vmatpush1.bf16.msra.mxu0 0
    %374 = vmatprep.subr.bf16.mxu0 0
    %375 = vmatpush1.bf16.msra.mxu0 0
    %376 = vmatprep.subr.bf16.mxu0 0
    %377 = vmatpush1.bf16.msra.mxu0 0
    %378 = vmatprep.subr.bf16.mxu0 0
    %379 = vmatpush1.bf16.msra.mxu0 0
    %380 = vmatprep.subr.bf16.mxu0 0
    %381 = vmatpush1.bf16.msra.mxu0 0
    %382 = vmatprep.subr.bf16.mxu0 0
    %383 = vmatpush1.bf16.msra.mxu0 0
    %384 = vmatprep.subr.bf16.mxu0 0
    %385 = vmatpush1.bf16.msra.mxu0 0
    %386 = vmatprep.subr.bf16.mxu0 0
    %387 = vmatpush1.bf16.msra.mxu0 0
    %388 = vmatprep.mubr.bf16.mxu0 0
    %389 = vmatmul.mubr.bf16.gmra.mrb[0].mxu0 %v354
    %v390 = vpop.f32.mrb[0].mxu0
    %v391 = vadd.f32 0.0, %v390
    %v392 = vpop.f32.mrb[0].mxu0
    %v393 = vpop.f32.mrb[0].mxu0
    %v394 = vpop.f32.mrb[0].mxu0
    %395 = vdwg.mxu0
    %v396 = vadd.f32 %v138, %v391
    %v397 = vxor.u32 %v396, 2147483648
    %v398 = vmul.f32 %v397, 1.442695
    %v399 = vpow.pop %v398
    %v400 = vadd.f32 %v399, 1.0
    %v401 = vrcp.pop %v400
    %v402 = vmul.f32 1.0, %v401
    %v403 = vmul.f32 %v402, 2.0
    %v404 = vsub.f32 %v403, 1.0
    %v405 = vmul.f32 %v402, %v336
    %407 = vrot.lane.b32.xlu0 %v404, 64
    %v408 = vpop.permute.xlu0 %407
    %v410 = vmul.f32 %v402, %v408
    %412 = vrot.lane.b32.xlu0 %v410, 32
    %v413 = vpop.permute.xlu0 %412
    %v415 = vadd.f32 %v405, %v413
    %v416 = vtanh.pop %v415
    %418 = vrot.lane.b32.xlu0 %v416, 64
    %v419 = vpop.permute.xlu0 %418
    %v421 = vmul.f32 %v402, %v419
    %423 = vrot.lane.b32.xlu0 %v421, 32
    %v424 = vpop.permute.xlu0 %423
    %426 = vrot.lane.b32.xlu0 %v421, 64
    %v427 = vpop.permute.xlu0 %426
    %v429 = vsel %vm59, %v424, %v427
    %v430 = vsel %vm158, %v429, 0.0
    %v431 = vpack.c.bf16 %v430, %v430
    %v433 = vsel %vm194, %v431, 0
    %435 = vmatprep.subr.bf16.mxu0 0
    %436 = vmatpush1.bf16.msra.mxu0 %v147
    %437 = vmatprep.subr.bf16.mxu0 0
    %438 = vmatpush1.bf16.msra.mxu0 %v148
    %439 = vmatprep.subr.bf16.mxu0 0
    %440 = vmatpush1.bf16.msra.mxu0 %v149
    %441 = vmatprep.subr.bf16.mxu0 0
    %442 = vmatpush1.bf16.msra.mxu0 %v150
    %443 = vmatprep.subr.bf16.mxu0 0
    %444 = vmatpush1.bf16.msra.mxu0 0
    %445 = vmatprep.subr.bf16.mxu0 0
    %446 = vmatpush1.bf16.msra.mxu0 0
    %447 = vmatprep.subr.bf16.mxu0 0
    %448 = vmatpush1.bf16.msra.mxu0 0
    %449 = vmatprep.subr.bf16.mxu0 0
    %450 = vmatpush1.bf16.msra.mxu0 0
    %451 = vmatprep.subr.bf16.mxu0 0
    %452 = vmatpush1.bf16.msra.mxu0 0
    %453 = vmatprep.subr.bf16.mxu0 0
    %454 = vmatpush1.bf16.msra.mxu0 0
    %455 = vmatprep.subr.bf16.mxu0 0
    %456 = vmatpush1.bf16.msra.mxu0 0
    %457 = vmatprep.subr.bf16.mxu0 0
    %458 = vmatpush1.bf16.msra.mxu0 0
    %459 = vmatprep.subr.bf16.mxu0 0
    %460 = vmatpush1.bf16.msra.mxu0 0
    %461 = vmatprep.subr.bf16.mxu0 0
    %462 = vmatpush1.bf16.msra.mxu0 0
    %463 = vmatprep.subr.bf16.mxu0 0
    %464 = vmatpush1.bf16.msra.mxu0 0
    %465 = vmatprep.subr.bf16.mxu0 0
    %466 = vmatpush1.bf16.msra.mxu0 0
    %467 = vmatprep.mubr.bf16.mxu0 0
    %468 = vmatmul.mubr.bf16.gmra.mrb[0].mxu0 %v433
    %v469 = vpop.f32.mrb[0].mxu0
    %v470 = vadd.f32 0.0, %v469
    %v471 = vpop.f32.mrb[0].mxu0
    %v472 = vpop.f32.mrb[0].mxu0
    %v473 = vpop.f32.mrb[0].mxu0
    %474 = vdwg.mxu0
    %v475 = vadd.f32 %v138, %v470
    %v476 = vxor.u32 %v475, 2147483648
    %v477 = vmul.f32 %v476, 1.442695
    %v478 = vpow.pop %v477
    %v479 = vadd.f32 %v478, 1.0
    %v480 = vrcp.pop %v479
    %v481 = vmul.f32 1.0, %v480
    %v482 = vmul.f32 %v481, 2.0
    %v483 = vsub.f32 %v482, 1.0
    %v484 = vmul.f32 %v481, %v415
    %486 = vrot.lane.b32.xlu0 %v483, 64
    %v487 = vpop.permute.xlu0 %486
    %v489 = vmul.f32 %v481, %v487
    %491 = vrot.lane.b32.xlu0 %v489, 32
    %v492 = vpop.permute.xlu0 %491
    %v494 = vadd.f32 %v484, %v492
    %v495 = vtanh.pop %v494
    %497 = vrot.lane.b32.xlu0 %v495, 64
    %v498 = vpop.permute.xlu0 %497
    %v500 = vmul.f32 %v481, %v498
    %502 = vrot.lane.b32.xlu0 %v500, 32
    %v503 = vpop.permute.xlu0 %502
    %505 = vrot.lane.b32.xlu0 %v500, 64
    %v506 = vpop.permute.xlu0 %505
    %v508 = vsel %vm59, %v503, %v506
    %v509 = vsel %vm158, %v508, 0.0
    %v510 = vpack.c.bf16 %v509, %v509
    %v512 = vsel %vm194, %v510, 0
    %514 = vmatprep.subr.bf16.mxu0 0
    %515 = vmatpush1.bf16.msra.mxu0 %v147
    %516 = vmatprep.subr.bf16.mxu0 0
    %517 = vmatpush1.bf16.msra.mxu0 %v148
    %518 = vmatprep.subr.bf16.mxu0 0
    %519 = vmatpush1.bf16.msra.mxu0 %v149
    %520 = vmatprep.subr.bf16.mxu0 0
    %521 = vmatpush1.bf16.msra.mxu0 %v150
    %522 = vmatprep.subr.bf16.mxu0 0
    %523 = vmatpush1.bf16.msra.mxu0 0
    %524 = vmatprep.subr.bf16.mxu0 0
    %525 = vmatpush1.bf16.msra.mxu0 0
    %526 = vmatprep.subr.bf16.mxu0 0
    %527 = vmatpush1.bf16.msra.mxu0 0
    %528 = vmatprep.subr.bf16.mxu0 0
    %529 = vmatpush1.bf16.msra.mxu0 0
    %530 = vmatprep.subr.bf16.mxu0 0
    %531 = vmatpush1.bf16.msra.mxu0 0
    %532 = vmatprep.subr.bf16.mxu0 0
    %533 = vmatpush1.bf16.msra.mxu0 0
    %534 = vmatprep.subr.bf16.mxu0 0
    %535 = vmatpush1.bf16.msra.mxu0 0
    %536 = vmatprep.subr.bf16.mxu0 0
    %537 = vmatpush1.bf16.msra.mxu0 0
    %538 = vmatprep.subr.bf16.mxu0 0
    %539 = vmatpush1.bf16.msra.mxu0 0
    %540 = vmatprep.subr.bf16.mxu0 0
    %541 = vmatpush1.bf16.msra.mxu0 0
    %542 = vmatprep.subr.bf16.mxu0 0
    %543 = vmatpush1.bf16.msra.mxu0 0
    %544 = vmatprep.subr.bf16.mxu0 0
    %545 = vmatpush1.bf16.msra.mxu0 0
    %546 = vmatprep.mubr.bf16.mxu0 0
    %547 = vmatmul.mubr.bf16.gmra.mrb[0].mxu0 %v512
    %v548 = vpop.f32.mrb[0].mxu0
    %v549 = vadd.f32 0.0, %v548
    %v550 = vpop.f32.mrb[0].mxu0
    %v551 = vpop.f32.mrb[0].mxu0
    %v552 = vpop.f32.mrb[0].mxu0
    %553 = vdwg.mxu0
    %v554 = vadd.f32 %v138, %v549
    %v555 = vxor.u32 %v554, 2147483648
    %v556 = vmul.f32 %v555, 1.442695
    %v557 = vpow.pop %v556
    %v558 = vadd.f32 %v557, 1.0
    %v559 = vrcp.pop %v558
    %v560 = vmul.f32 1.0, %v559
    %v561 = vmul.f32 %v560, 2.0
    %v562 = vsub.f32 %v561, 1.0
    %v563 = vmul.f32 %v560, %v494
    %565 = vrot.lane.b32.xlu0 %v562, 64
    %v566 = vpop.permute.xlu0 %565
    %v568 = vmul.f32 %v560, %v566
    %570 = vrot.lane.b32.xlu0 %v568, 32
    %v571 = vpop.permute.xlu0 %570
    %v573 = vadd.f32 %v563, %v571
    %v574 = vtanh.pop %v573
    %576 = vrot.lane.b32.xlu0 %v574, 64
    %v577 = vpop.permute.xlu0 %576
    %v579 = vmul.f32 %v560, %v577
    %581 = vrot.lane.b32.xlu0 %v579, 32
    %v582 = vpop.permute.xlu0 %581
    %584 = vrot.lane.b32.xlu0 %v579, 64
    %v585 = vpop.permute.xlu0 %584
    %v587 = vsel %vm59, %v582, %v585
    %v588 = vsel %vm158, %v587, 0.0
    %v589 = vpack.c.bf16 %v588, %v588
    %v591 = vsel %vm194, %v589, 0
    %593 = vmatprep.subr.bf16.mxu0 0
    %594 = vmatpush1.bf16.msra.mxu0 %v147
    %595 = vmatprep.subr.bf16.mxu0 0
    %596 = vmatpush1.bf16.msra.mxu0 %v148
    %597 = vmatprep.subr.bf16.mxu0 0
    %598 = vmatpush1.bf16.msra.mxu0 %v149
    %599 = vmatprep.subr.bf16.mxu0 0
    %600 = vmatpush1.bf16.msra.mxu0 %v150
    %601 = vmatprep.subr.bf16.mxu0 0
    %602 = vmatpush1.bf16.msra.mxu0 0
    %603 = vmatprep.subr.bf16.mxu0 0
    %604 = vmatpush1.bf16.msra.mxu0 0
    %605 = vmatprep.subr.bf16.mxu0 0
    %606 = vmatpush1.bf16.msra.mxu0 0
    %607 = vmatprep.subr.bf16.mxu0 0
    %608 = vmatpush1.bf16.msra.mxu0 0
    %609 = vmatprep.subr.bf16.mxu0 0
    %610 = vmatpush1.bf16.msra.mxu0 0
    %611 = vmatprep.subr.bf16.mxu0 0
    %612 = vmatpush1.bf16.msra.mxu0 0
    %613 = vmatprep.subr.bf16.mxu0 0
    %614 = vmatpush1.bf16.msra.mxu0 0
    %615 = vmatprep.subr.bf16.mxu0 0
    %616 = vmatpush1.bf16.msra.mxu0 0
    %617 = vmatprep.subr.bf16.mxu0 0
    %618 = vmatpush1.bf16.msra.mxu0 0
    %619 = vmatprep.subr.bf16.mxu0 0
    %620 = vmatpush1.bf16.msra.mxu0 0
    %621 = vmatprep.subr.bf16.mxu0 0
    %622 = vmatpush1.bf16.msra.mxu0 0
    %623 = vmatprep.subr.bf16.mxu0 0
    %624 = vmatpush1.bf16.msra.mxu0 0
    %625 = vmatprep.mubr.bf16.mxu0 0
    %626 = vmatmul.mubr.bf16.gmra.mrb[0].mxu0 %v591
    %v627 = vpop.f32.mrb[0].mxu0
    %v628 = vadd.f32 0.0, %v627
    %v629 = vpop.f32.mrb[0].mxu0
    %v630 = vpop.f32.mrb[0].mxu0
    %v631 = vpop.f32.mrb[0].mxu0
    %632 = vdwg.mxu0
    %v633 = vadd.f32 %v138, %v628
    %v634 = vxor.u32 %v633, 2147483648
    %v635 = vmul.f32 %v634, 1.442695
    %v636 = vpow.pop %v635
    %v637 = vadd.f32 %v636, 1.0
    %v638 = vrcp.pop %v637
    %v639 = vmul.f32 1.0, %v638
    %v640 = vmul.f32 %v639, 2.0
    %v641 = vsub.f32 %v640, 1.0
    %v642 = vmul.f32 %v639, %v573
    %644 = vrot.lane.b32.xlu0 %v641, 64
    %v645 = vpop.permute.xlu0 %644
    %v647 = vmul.f32 %v639, %v645
    %649 = vrot.lane.b32.xlu0 %v647, 32
    %v650 = vpop.permute.xlu0 %649
    %v652 = vadd.f32 %v642, %v650
    %v653 = vtanh.pop %v652
    %655 = vrot.lane.b32.xlu0 %v653, 64
    %v656 = vpop.permute.xlu0 %655
    %v658 = vmul.f32 %v639, %v656
    %660 = vrot.lane.b32.xlu0 %v658, 32
    %v661 = vpop.permute.xlu0 %660
    %663 = vrot.lane.b32.xlu0 %v658, 64
    %v664 = vpop.permute.xlu0 %663
    %v666 = vsel %vm59, %v661, %v664
    %v667 = vsel %vm158, %v666, 0.0
    %v668 = vpack.c.bf16 %v667, %v667
    %v670 = vsel %vm194, %v668, 0
    %672 = vmatprep.subr.bf16.mxu0 0
    %673 = vmatpush1.bf16.msra.mxu0 %v147
    %674 = vmatprep.subr.bf16.mxu0 0
    %675 = vmatpush1.bf16.msra.mxu0 %v148
    %676 = vmatprep.subr.bf16.mxu0 0
    %677 = vmatpush1.bf16.msra.mxu0 %v149
    %678 = vmatprep.subr.bf16.mxu0 0
    %679 = vmatpush1.bf16.msra.mxu0 %v150
    %680 = vmatprep.subr.bf16.mxu0 0
    %681 = vmatpush1.bf16.msra.mxu0 0
    %682 = vmatprep.subr.bf16.mxu0 0
    %683 = vmatpush1.bf16.msra.mxu0 0
    %684 = vmatprep.subr.bf16.mxu0 0
    %685 = vmatpush1.bf16.msra.mxu0 0
    %686 = vmatprep.subr.bf16.mxu0 0
    %687 = vmatpush1.bf16.msra.mxu0 0
    %688 = vmatprep.subr.bf16.mxu0 0
    %689 = vmatpush1.bf16.msra.mxu0 0
    %690 = vmatprep.subr.bf16.mxu0 0
    %691 = vmatpush1.bf16.msra.mxu0 0
    %692 = vmatprep.subr.bf16.mxu0 0
    %693 = vmatpush1.bf16.msra.mxu0 0
    %694 = vmatprep.subr.bf16.mxu0 0
    %695 = vmatpush1.bf16.msra.mxu0 0
    %696 = vmatprep.subr.bf16.mxu0 0
    %697 = vmatpush1.bf16.msra.mxu0 0
    %698 = vmatprep.subr.bf16.mxu0 0
    %699 = vmatpush1.bf16.msra.mxu0 0
    %700 = vmatprep.subr.bf16.mxu0 0
    %701 = vmatpush1.bf16.msra.mxu0 0
    %702 = vmatprep.subr.bf16.mxu0 0
    %703 = vmatpush1.bf16.msra.mxu0 0
    %704 = vmatprep.mubr.bf16.mxu0 0
    %705 = vmatmul.mubr.bf16.gmra.mrb[0].mxu0 %v670
    %v706 = vpop.f32.mrb[0].mxu0
    %v707 = vadd.f32 0.0, %v706
    %v708 = vpop.f32.mrb[0].mxu0
    %v709 = vpop.f32.mrb[0].mxu0
    %v710 = vpop.f32.mrb[0].mxu0
    %711 = vdwg.mxu0
    %v712 = vadd.f32 %v138, %v707
    %v713 = vxor.u32 %v712, 2147483648
    %v714 = vmul.f32 %v713, 1.442695
    %v715 = vpow.pop %v714
    %v716 = vadd.f32 %v715, 1.0
    %v717 = vrcp.pop %v716
    %v718 = vmul.f32 1.0, %v717
    %v719 = vmul.f32 %v718, 2.0
    %v720 = vsub.f32 %v719, 1.0
    %v721 = vmul.f32 %v718, %v652
    %723 = vrot.lane.b32.xlu0 %v720, 64
    %v724 = vpop.permute.xlu0 %723
    %v726 = vmul.f32 %v718, %v724
    %728 = vrot.lane.b32.xlu0 %v726, 32
    %v729 = vpop.permute.xlu0 %728
    %v731 = vadd.f32 %v721, %v729
    %v732 = vtanh.pop %v731
    %734 = vrot.lane.b32.xlu0 %v732, 64
    %v735 = vpop.permute.xlu0 %734
    %v737 = vmul.f32 %v718, %v735
    %v739 = vrot.slane %v737, 2
    %740 = vrot.lane.b32.xlu0 %v739, 64
    %v741 = vpop.permute.xlu0 %740
    %v743 = vsel %vm59, %v186, %v741
    %v744 = vrot.slane %v658, 2
    %745 = vrot.lane.b32.xlu0 %v744, 64
    %v746 = vpop.permute.xlu0 %745
    %v748 = vsel %vm59, %v266, %v746
    %v749 = vrot.slane %v579, 2
    %750 = vrot.lane.b32.xlu0 %v749, 64
    %v751 = vpop.permute.xlu0 %750
    %v753 = vsel %vm59, %v345, %v751
    %v754 = vrot.slane %v500, 2
    %755 = vrot.lane.b32.xlu0 %v754, 64
    %v756 = vpop.permute.xlu0 %755
    %v758 = vsel %vm59, %v424, %v756
    %v759 = vrot.slane %v421, 2
    %760 = vrot.lane.b32.xlu0 %v759, 64
    %v761 = vpop.permute.xlu0 %760
    %v763 = vsel %vm59, %v503, %v761
    %v764 = vrot.slane %v342, 2
    %765 = vrot.lane.b32.xlu0 %v764, 64
    %v766 = vpop.permute.xlu0 %765
    %v768 = vsel %vm59, %v582, %v766
    %v769 = vrot.slane %v263, 2
    %770 = vrot.lane.b32.xlu0 %v769, 64
    %v771 = vpop.permute.xlu0 %770
    %v773 = vsel %vm59, %v661, %v771
    %774 = vrot.lane.b32.xlu0 %v737, 32
    %v775 = vpop.permute.xlu0 %774
    %v777 = vrot.slane %v183, 2
    %778 = vrot.lane.b32.xlu0 %v777, 64
    %v779 = vpop.permute.xlu0 %778
    %v781 = vsel %vm59, %v775, %v779
    %v783 = vrot.slane %v748, 6
    %v786 = vrot.slane %v753, 4
    %v789 = vrot.slane %v758, 2
    %v792 = vrot.slane %v768, 6
    %v795 = vrot.slane %v773, 4
    %v798 = vrot.slane %v781, 2
    %v800 = vsel %vm137, %v743, %v783
    %vm801 = vcmask 1043456
    %v802 = vsel %vm801, %v800, %v786
    %vm803 = vcmask 1045504
    %v804 = vsel %vm803, %v802, %v789
    %v805 = vsel %vm137, %v763, %v792
    %v806 = vsel %vm801, %v805, %v795
    %v807 = vsel %vm803, %v806, %v798
    %v808 = vld [vmem:[%s4] sm:$0xff]
    %v809 = vld [vmem:[%s4 + $0x8] sm:$0xff]
    %v810 = vld [vmem:[%s4 + $0x10] sm:$0xff]
    %v811 = vld [vmem:[%s4 + $0x18] sm:$0xff]
    %v812 = vld [vmem:[%s4 + $0x20] sm:$0xff]
    %v813 = vld [vmem:[%s4 + $0x28] sm:$0xff]
    %v814 = vld [vmem:[%s4 + $0x30] sm:$0xff]
    %v815 = vld [vmem:[%s4 + $0x38] sm:$0xff]
    %v816 = vld [vmem:[%s5] sm:$0x1]
    %v818 = vlaneseq
    %v819 = vshrl.u32 %v818, 7
    %v820 = vsub.s32 0, %v819
    %v821 = vrot.slane %v816, %v820
    %v824 = vsel %vm194, %v804, 0
    %v827 = vsel %vm194, %v807, 0
    %829 = vmatprep.subr.mxu0 0.0
    %830 = vmatpush1.msra.mxu0 %v808
    %831 = vmatprep.subr.mxu0 0.0
    %832 = vmatpush1.msra.mxu0 %v809
    %833 = vmatprep.subr.mxu0 0.0
    %834 = vmatpush1.msra.mxu0 %v810
    %835 = vmatprep.subr.mxu0 0.0
    %836 = vmatpush1.msra.mxu0 %v811
    %837 = vmatprep.subr.mxu0 0.0
    %838 = vmatpush1.msra.mxu0 %v812
    %839 = vmatprep.subr.mxu0 0.0
    %840 = vmatpush1.msra.mxu0 %v813
    %841 = vmatprep.subr.mxu0 0.0
    %842 = vmatpush1.msra.mxu0 %v814
    %843 = vmatprep.subr.mxu0 0.0
    %844 = vmatpush1.msra.mxu0 %v815
    %845 = vmatprep.subr.mxu0 0.0
    %846 = vmatpush1.msra.mxu0 0.0
    %847 = vmatprep.subr.mxu0 0.0
    %848 = vmatpush1.msra.mxu0 0.0
    %849 = vmatprep.subr.mxu0 0.0
    %850 = vmatpush1.msra.mxu0 0.0
    %851 = vmatprep.subr.mxu0 0.0
    %852 = vmatpush1.msra.mxu0 0.0
    %853 = vmatprep.subr.mxu0 0.0
    %854 = vmatpush1.msra.mxu0 0.0
    %855 = vmatprep.subr.mxu0 0.0
    %856 = vmatpush1.msra.mxu0 0.0
    %857 = vmatprep.subr.mxu0 0.0
    %858 = vmatpush1.msra.mxu0 0.0
    %859 = vmatprep.subr.mxu0 0.0
    %860 = vmatpush1.msra.mxu0 0.0
    %861 = vmatprep.subr.mxu0 0.0
    %862 = vmatpush1.msra.mxu0 0.0
    %863 = vmatprep.subr.mxu0 0.0
    %864 = vmatpush1.msra.mxu0 0.0
    %865 = vmatprep.subr.mxu0 0.0
    %866 = vmatpush1.msra.mxu0 0.0
    %867 = vmatprep.subr.mxu0 0.0
    %868 = vmatpush1.msra.mxu0 0.0
    %869 = vmatprep.subr.mxu0 0.0
    %870 = vmatpush1.msra.mxu0 0.0
    %871 = vmatprep.subr.mxu0 0.0
    %872 = vmatpush1.msra.mxu0 0.0
    %873 = vmatprep.subr.mxu0 0.0
    %874 = vmatpush1.msra.mxu0 0.0
    %875 = vmatprep.subr.mxu0 0.0
    %876 = vmatpush1.msra.mxu0 0.0
    %877 = vmatprep.subr.mxu0 0.0
    %878 = vmatpush1.msra.mxu0 0.0
    %879 = vmatprep.subr.mxu0 0.0
    %880 = vmatpush1.msra.mxu0 0.0
    %881 = vmatprep.subr.mxu0 0.0
    %882 = vmatpush1.msra.mxu0 0.0
    %883 = vmatprep.subr.mxu0 0.0
    %884 = vmatpush1.msra.mxu0 0.0
    %885 = vmatprep.subr.mxu0 0.0
    %886 = vmatpush1.msra.mxu0 0.0
    %887 = vmatprep.subr.mxu0 0.0
    %888 = vmatpush1.msra.mxu0 0.0
    %889 = vmatprep.subr.mxu0 0.0
    %890 = vmatpush1.msra.mxu0 0.0
    %891 = vmatprep.subr.mxu0 0.0
    %892 = vmatpush1.msra.mxu0 0.0
    %893 = vmatprep.mubr.f32.mxu0 0.0
    %894 = vmatmul.mubr.f32.gmra.mrb[0].mxu0 %v824
    %v895 = vpop.f32.mrb[0].mxu0
    %v896 = vadd.f32 %v821, %v895
    %v897 = vpop.f32.mrb[0].mxu0
    %898 = vmatprep.mubr.f32.mxu0 0.0
    %899 = vmatmul.mubr.f32.gmra.mrb[0].mxu0 %v827
    %v900 = vpop.f32.mrb[0].mxu0
    %v901 = vadd.f32 %v821, %v900
    %v902 = vpop.f32.mrb[0].mxu0
    %903 = vdwg.mxu0
    %vm904 = vcmask 31744
    %905 = vst.msk [vmem:[%s6] sm:$0xff] %vm904, %v896
    %906 = vst.msk [vmem:[%s6 + $0x8] sm:$0xff] %vm904, %v901
    // Predicated region
    $region30: #{tpu_custom_call.1} parent=1 // pred_check
      _
    $region31: #{tpu_custom_call.1} parent=1 // pred_check_branch
      %908 = sbr.rel (0) target = $region33
    $region32: #{tpu_custom_call.1} parent=1 // pred_region
      _
    $region33: #{tpu_custom_call.1} parent=1 // pred_fallthru
      _
    // Predicated region
    $region34: #{tpu_custom_call.1} parent=1 // pred_check
      _
    $region35: #{tpu_custom_call.1} parent=1 // pred_check_branch
      %910 = sbr.rel (0) target = $region37
    $region36: #{tpu_custom_call.1} parent=1 // pred_region
      _
    $region37: #{tpu_custom_call.1} parent=1 // pred_fallthru
      _
    %911 = vsyncpa [#allocation3], 1

</llo_original>
